<compile_context>
chip_gen: v5e
topology: v5e:2x2
jax: 0.10.0
libtpu: 0.0.40
codegen_flags: <defaults>
</compile_context>

<pallas_src>
import functools

import jax
import jax.numpy as jnp
from jax.experimental import pallas as pl
from jax.experimental.pallas import tpu as pltpu


# ------------------------------ fused kernel -------------------------------

def _fused_kernel(xe_ref, xo_ref, rhs_ref, cb_ref, wfc_ref, fcb_ref, o_ref,
                  pool_ref, flat_ref, *, k, Ho, WC):
    """One grid step == one batch element.  All intermediates stay in VMEM.

    xe_ref/xo_ref: even/odd padded input rows, (Hp//2, Wp*Cin)
    rhs_ref:       banded conv weights, (2*k, Wp*Cin, Wo*Cout), index di*2 + w_parity
    cb_ref:        conv bias tiled over Wo, (1, Wo*Cout)
    wfc_ref:       fc1 weight, NHWC-flat x hidden, (Ho*Wo*Cout, hidden)
    fcb_ref:       fc1 bias, (1, hidden)
    o_ref:         output block, (1, hidden)
    """
    parity_refs = (xe_ref, xo_ref)
    m = None                                    # running 2x2-window max, (Ho, Wo*Cout)
    for hp in range(2):                         # output-row parity (vertical pool)
        s = [None, None]                        # conv partials for even / odd output cols
        for di in range(k):                     # conv kernel row
            start = hp + di                     # padded-input row offset
            lhs = parity_refs[start % 2][start // 2: start // 2 + Ho, :]  # (Ho, Wp*Cin)
            for p in range(2):                  # output-col parity (horizontal pool)
                part = jnp.dot(lhs, rhs_ref[di * 2 + p],
                               preferred_element_type=jnp.float32)
                s[p] = part if s[p] is None else s[p] + part
        mh = jnp.maximum(s[0], s[1])
        m = mh if m is None else jnp.maximum(m, mh)

    # Same bias for all 4 window taps and ReLU is monotone, so bias+ReLU after the max.
    pool_ref[...] = jnp.maximum(m + cb_ref[...], 0.0)          # (Ho, Wo*Cout)

    # NHWC flatten into one (1, Ho*Wo*Cout) VMEM row (fc weight is pre-permuted to match).
    for ho in range(Ho):
        flat_ref[:, ho * WC:(ho + 1) * WC] = pool_ref[ho:ho + 1, :]

    y = jnp.dot(flat_ref[...], wfc_ref[...], preferred_element_type=jnp.float32)
    o_ref[...] = jnp.maximum(y + fcb_ref[...], 0.0)


# --------------------------- one-time weight prep ---------------------------

def prepare_params(params, H, W):
    """Fold conv lowering + NCHW-flatten permutation into the weights (call once)."""
    conv_w = params["conv_w"].astype(jnp.float32)      # (Cout, Cin, k, k) PyTorch layout
    conv_b = params["conv_b"].astype(jnp.float32)      # (Cout,)
    fc_w = params["fc1_w"].astype(jnp.float32)         # (hidden, Cout*Ho*Wo)
    fc_b = params["fc1_b"].astype(jnp.float32)         # (hidden,)
    Cout, Cin, k, _ = conv_w.shape
    hidden = fc_w.shape[0]
    Wp, Ho, Wo = W + 2, H // 2, W // 2

    # Banded block-Toeplitz conv weight:
    #   rhs[di*2+p, wp*Cin+ci, wo*Cout+co] = conv_w[co, ci, di, wp-(2*wo+p)]  (0 off-band)
    wk = jnp.transpose(conv_w, (2, 3, 1, 0))           # (k, k, Cin, Cout)
    dj = (jnp.arange(Wp)[:, None, None]
          - (2 * jnp.arange(Wo)[None, :, None] + jnp.arange(2)[None, None, :]))  # (Wp,Wo,2)
    valid = ((dj >= 0) & (dj < k)).astype(jnp.float32)
    djc = jnp.clip(dj, 0, k - 1)
    blocks = wk[:, djc, :, :] * valid[None, :, :, :, None, None]   # (k,Wp,Wo,2,Cin,Cout)
    rhs = jnp.transpose(blocks, (0, 3, 1, 4, 2, 5)).reshape(2 * k, Wp * Cin, Wo * Cout)

    cb_row = jnp.tile(conv_b, (Wo,)).reshape(1, Wo * Cout)

    # fc1 weight with PyTorch's NCHW flatten folded into an NHWC-ordered (K, hidden) matrix.
    wfc = jnp.transpose(fc_w.reshape(hidden, Cout, Ho, Wo), (2, 3, 1, 0))
    wfc = wfc.reshape(Ho * Wo * Cout, hidden)
    fcb_row = fc_b.reshape(1, hidden)
    return {"rhs": rhs, "cb_row": cb_row, "wfc": wfc, "fcb_row": fcb_row}


# ------------------------------ forward pass --------------------------------

def extractor_embeddings_forward(x_nchw, prep):
    """Pallas forward: conv3x3(pad=1)+ReLU -> maxpool2x2 -> NCHW flatten -> fc1 -> ReLU."""
    N, Cin, H, W = x_nchw.shape
    Hp, Wp = H + 2, W + 2
    Ho, Wo = H // 2, W // 2
    rhs, cb_row, wfc, fcb_row = prep["rhs"], prep["cb_row"], prep["wfc"], prep["fcb_row"]
    k = rhs.shape[0] // 2
    KK = Wp * Cin
    WC = rhs.shape[2]                                  # Wo * Cout
    hidden = wfc.shape[1]
    assert rhs.shape[1] == KK and wfc.shape[0] == Ho * WC

    # Tiny per-call glue on a ~16 KB tensor: NCHW -> padded NHWC, rows split by parity so
    # every in-kernel access is a contiguous static slice (no im2col expansion in HBM).
    x = jnp.transpose(x_nchw, (0, 2, 3, 1)).astype(jnp.float32)
    xp = jnp.pad(x, ((0, 0), (1, 1), (1, 1), (0, 0))).reshape(N, Hp, KK)
    xe = xp[:, 0::2, :]                                # (N, Hp//2, Wp*Cin)
    xo = xp[:, 1::2, :]

    kernel = functools.partial(_fused_kernel, k=k, Ho=Ho, WC=WC)
    out = pl.pallas_call(
        kernel,
        out_shape=jax.ShapeDtypeStruct((N, 1, hidden), jnp.float32),
        grid=(N,),
        in_specs=[
            pl.BlockSpec((None, Hp // 2, KK), lambda n: (n, 0, 0)),   # even rows
            pl.BlockSpec((None, Hp // 2, KK), lambda n: (n, 0, 0)),   # odd rows
            pl.BlockSpec((2 * k, KK, WC), lambda n: (0, 0, 0)),       # banded conv weight
            pl.BlockSpec((1, WC), lambda n: (0, 0)),                  # conv bias row
            pl.BlockSpec((Ho * WC, hidden), lambda n: (0, 0)),        # fc1 weight
            pl.BlockSpec((1, hidden), lambda n: (0, 0)),              # fc1 bias row
        ],
        out_specs=pl.BlockSpec((None, 1, hidden), lambda n: (n, 0, 0)),
        scratch_shapes=[
            pltpu.VMEM((Ho, WC), jnp.float32),         # pooled activation
            pltpu.VMEM((1, Ho * WC), jnp.float32),     # NHWC-flattened activation
        ],
        compiler_params=pltpu.CompilerParams(
            dimension_semantics=("parallel",)),        # batch axis -> both TCs on v7x
    )(xe, xo, rhs, cb_row, wfc, fcb_row)
    return out.reshape(N, hidden)


# ------------------------------ reference -----------------------------------

def _reference_forward(x_nchw, params):
    """Plain-JAX reference of the assumed module, used only for the self-check."""
    y = jax.lax.conv_general_dilated(
        x_nchw.astype(jnp.float32), params["conv_w"],
        window_strides=(1, 1), padding=((1, 1), (1, 1)),
        dimension_numbers=("NCHW", "OIHW", "NCHW"),
        precision=jax.lax.Precision.HIGHEST)
    y = jnp.maximum(y + params["conv_b"][None, :, None, None], 0.0)
    y = jax.lax.reduce_window(y, -jnp.inf, jax.lax.max,
                              (1, 1, 2, 2), (1, 1, 2, 2), "VALID")
    flat = y.reshape(x_nchw.shape[0], -1)              # NCHW flatten order
    out = flat @ params["fc1_w"].T + params["fc1_b"]
    return jnp.maximum(out, 0.0)


# --------------------------------- main --------------------------------------

if __name__ == "__main__":
    key = jax.random.PRNGKey(0)
    k_x, k_cw, k_cb, k_fw, k_fb = jax.random.split(key, 5)

    N, Cin, H, W = 2, 4, 16, 16
    Cout, hidden = 8, 32
    fc_in = Cout * (H // 2) * (W // 2)                 # 512

    x = jax.random.normal(k_x, (N, Cin, H, W), dtype=jnp.float32)
    params = {
        "conv_w": 0.1 * jax.random.normal(k_cw, (Cout, Cin, 3, 3), dtype=jnp.float32),
        "conv_b": 0.1 * jax.random.normal(k_cb, (Cout,), dtype=jnp.float32),
        "fc1_w": 0.05 * jax.random.normal(k_fw, (hidden, fc_in), dtype=jnp.float32),
        "fc1_b": 0.05 * jax.random.normal(k_fb, (hidden,), dtype=jnp.float32),
    }

    prep = prepare_params(params, H, W)                # one-time weight prep (outside jit)
    fwd = jax.jit(extractor_embeddings_forward)
    out = jax.block_until_ready(fwd(x, prep))

    ref = jax.block_until_ready(_reference_forward(x, params))
    assert out.shape == (N, hidden), out.shape
    assert bool(jnp.allclose(out, ref, rtol=5e-3, atol=5e-3)), \
        float(jnp.max(jnp.abs(out - ref)))
    print("KERNEL_OK")
</pallas_src>

<mosaic_0001>
module attributes {stable_mosaic.version = 11 : i64} {
  func.func @_fused_kernel(%arg0: i32, %arg1: memref<1x9x72xf32, #tpu.memory_space<vmem>>, %arg2: memref<1x9x72xf32, #tpu.memory_space<vmem>>, %arg3: memref<6x72x64xf32, #tpu.memory_space<vmem>>, %arg4: memref<1x64xf32, #tpu.memory_space<vmem>>, %arg5: memref<512x32xf32, #tpu.memory_space<vmem>>, %arg6: memref<1x32xf32, #tpu.memory_space<vmem>>, %arg7: memref<1x1x32xf32, #tpu.memory_space<vmem>>, %arg8: memref<8x64xf32, #tpu.memory_space<vmem>>, %arg9: memref<1x512xf32, #tpu.memory_space<vmem>>) attributes {dimension_semantics = [#tpu.dimension_semantics<parallel>], iteration_bounds = array<i64: 2>, scalar_prefetch = 0 : i64, scratch_operands = 2 : i64, tpu.core_type = #tpu.core_type<tc>, window_params = [{transform_indices = @transform_0, window_bounds = array<i64: 1, 9, 72>}, {transform_indices = @transform_1, window_bounds = array<i64: 1, 9, 72>}, {pipeline_mode = #tpu.pipeline_mode<synchronous>, transform_indices = @transform_2, window_bounds = array<i64: 6, 72, 64>}, {pipeline_mode = #tpu.pipeline_mode<synchronous>, transform_indices = @transform_3, window_bounds = array<i64: 1, 64>}, {pipeline_mode = #tpu.pipeline_mode<synchronous>, transform_indices = @transform_4, window_bounds = array<i64: 512, 32>}, {pipeline_mode = #tpu.pipeline_mode<synchronous>, transform_indices = @transform_5, window_bounds = array<i64: 1, 32>}, {transform_indices = @transform_6, window_bounds = array<i64: 1, 1, 32>}]} {
    %c0 = arith.constant 0 : index
    %c0_0 = arith.constant 0 : index
    %c0_1 = arith.constant 0 : index
    %0 = vector.load %arg1[%c0, %c0_0, %c0_1] : memref<1x9x72xf32, #tpu.memory_space<vmem>>, vector<1x8x72xf32>
    %1 = vector.shape_cast %0 : vector<1x8x72xf32> to vector<8x72xf32>
    %c0_2 = arith.constant 0 : index
    %c0_3 = arith.constant 0 : index
    %c0_4 = arith.constant 0 : index
    %2 = vector.load %arg3[%c0_2, %c0_3, %c0_4] : memref<6x72x64xf32, #tpu.memory_space<vmem>>, vector<1x72x64xf32>
    %3 = vector.shape_cast %2 : vector<1x72x64xf32> to vector<72x64xf32>
    %cst = arith.constant dense<0.000000e+00> : vector<8x64xf32>
    %4 = tpu.matmul %1, %3, %cst {dimension_numbers = #tpu.dot_dimension_numbers<[1], [0], [0], [1], [0, 0, 1, 1], [], []>} : vector<8x72xf32>, vector<72x64xf32>, vector<8x64xf32> -> vector<8x64xf32>
    %c1 = arith.constant 1 : index
    %c0_5 = arith.constant 0 : index
    %c0_6 = arith.constant 0 : index
    %5 = vector.load %arg3[%c1, %c0_5, %c0_6] : memref<6x72x64xf32, #tpu.memory_space<vmem>>, vector<1x72x64xf32>
    %6 = vector.shape_cast %5 : vector<1x72x64xf32> to vector<72x64xf32>
    %cst_7 = arith.constant dense<0.000000e+00> : vector<8x64xf32>
    %7 = tpu.matmul %1, %6, %cst_7 {dimension_numbers = #tpu.dot_dimension_numbers<[1], [0], [0], [1], [0, 0, 1, 1], [], []>} : vector<8x72xf32>, vector<72x64xf32>, vector<8x64xf32> -> vector<8x64xf32>
    %c0_8 = arith.constant 0 : index
    %c0_9 = arith.constant 0 : index
    %c0_10 = arith.constant 0 : index
    %8 = vector.load %arg2[%c0_8, %c0_9, %c0_10] : memref<1x9x72xf32, #tpu.memory_space<vmem>>, vector<1x8x72xf32>
    %9 = vector.shape_cast %8 : vector<1x8x72xf32> to vector<8x72xf32>
    %c2 = arith.constant 2 : index
    %c0_11 = arith.constant 0 : index
    %c0_12 = arith.constant 0 : index
    %10 = vector.load %arg3[%c2, %c0_11, %c0_12] : memref<6x72x64xf32, #tpu.memory_space<vmem>>, vector<1x72x64xf32>
    %11 = vector.shape_cast %10 : vector<1x72x64xf32> to vector<72x64xf32>
    %cst_13 = arith.constant dense<0.000000e+00> : vector<8x64xf32>
    %12 = tpu.matmul %9, %11, %cst_13 {dimension_numbers = #tpu.dot_dimension_numbers<[1], [0], [0], [1], [0, 0, 1, 1], [], []>} : vector<8x72xf32>, vector<72x64xf32>, vector<8x64xf32> -> vector<8x64xf32>
    %13 = arith.addf %4, %12 : vector<8x64xf32>
    %c3 = arith.constant 3 : index
    %c0_14 = arith.constant 0 : index
    %c0_15 = arith.constant 0 : index
    %14 = vector.load %arg3[%c3, %c0_14, %c0_15] : memref<6x72x64xf32, #tpu.memory_space<vmem>>, vector<1x72x64xf32>
    %15 = vector.shape_cast %14 : vector<1x72x64xf32> to vector<72x64xf32>
    %cst_16 = arith.constant dense<0.000000e+00> : vector<8x64xf32>
    %16 = tpu.matmul %9, %15, %cst_16 {dimension_numbers = #tpu.dot_dimension_numbers<[1], [0], [0], [1], [0, 0, 1, 1], [], []>} : vector<8x72xf32>, vector<72x64xf32>, vector<8x64xf32> -> vector<8x64xf32>
    %17 = arith.addf %7, %16 : vector<8x64xf32>
    %c0_17 = arith.constant 0 : index
    %c1_18 = arith.constant 1 : index
    %c0_19 = arith.constant 0 : index
    %18 = vector.load %arg1[%c0_17, %c1_18, %c0_19] : memref<1x9x72xf32, #tpu.memory_space<vmem>>, vector<1x8x72xf32>
    %19 = vector.shape_cast %18 : vector<1x8x72xf32> to vector<8x72xf32>
    %c4 = arith.constant 4 : index
    %c0_20 = arith.constant 0 : index
    %c0_21 = arith.constant 0 : index
    %20 = vector.load %arg3[%c4, %c0_20, %c0_21] : memref<6x72x64xf32, #tpu.memory_space<vmem>>, vector<1x72x64xf32>
    %21 = vector.shape_cast %20 : vector<1x72x64xf32> to vector<72x64xf32>
    %cst_22 = arith.constant dense<0.000000e+00> : vector<8x64xf32>
    %22 = tpu.matmul %19, %21, %cst_22 {dimension_numbers = #tpu.dot_dimension_numbers<[1], [0], [0], [1], [0, 0, 1, 1], [], []>} : vector<8x72xf32>, vector<72x64xf32>, vector<8x64xf32> -> vector<8x64xf32>
    %23 = arith.addf %13, %22 : vector<8x64xf32>
    %c5 = arith.constant 5 : index
    %c0_23 = arith.constant 0 : index
    %c0_24 = arith.constant 0 : index
    %24 = vector.load %arg3[%c5, %c0_23, %c0_24] : memref<6x72x64xf32, #tpu.memory_space<vmem>>, vector<1x72x64xf32>
    %25 = vector.shape_cast %24 : vector<1x72x64xf32> to vector<72x64xf32>
    %cst_25 = arith.constant dense<0.000000e+00> : vector<8x64xf32>
    %26 = tpu.matmul %19, %25, %cst_25 {dimension_numbers = #tpu.dot_dimension_numbers<[1], [0], [0], [1], [0, 0, 1, 1], [], []>} : vector<8x72xf32>, vector<72x64xf32>, vector<8x64xf32> -> vector<8x64xf32>
    %27 = arith.addf %17, %26 : vector<8x64xf32>
    %28 = arith.maximumf %23, %27 : vector<8x64xf32>
    %c0_26 = arith.constant 0 : index
    %c0_27 = arith.constant 0 : index
    %c0_28 = arith.constant 0 : index
    %29 = vector.load %arg2[%c0_26, %c0_27, %c0_28] : memref<1x9x72xf32, #tpu.memory_space<vmem>>, vector<1x8x72xf32>
    %30 = vector.shape_cast %29 : vector<1x8x72xf32> to vector<8x72xf32>
    %c0_29 = arith.constant 0 : index
    %c0_30 = arith.constant 0 : index
    %c0_31 = arith.constant 0 : index
    %31 = vector.load %arg3[%c0_29, %c0_30, %c0_31] : memref<6x72x64xf32, #tpu.memory_space<vmem>>, vector<1x72x64xf32>
    %32 = vector.shape_cast %31 : vector<1x72x64xf32> to vector<72x64xf32>
    %cst_32 = arith.constant dense<0.000000e+00> : vector<8x64xf32>
    %33 = tpu.matmul %30, %32, %cst_32 {dimension_numbers = #tpu.dot_dimension_numbers<[1], [0], [0], [1], [0, 0, 1, 1], [], []>} : vector<8x72xf32>, vector<72x64xf32>, vector<8x64xf32> -> vector<8x64xf32>
    %c1_33 = arith.constant 1 : index
    %c0_34 = arith.constant 0 : index
    %c0_35 = arith.constant 0 : index
    %34 = vector.load %arg3[%c1_33, %c0_34, %c0_35] : memref<6x72x64xf32, #tpu.memory_space<vmem>>, vector<1x72x64xf32>
    %35 = vector.shape_cast %34 : vector<1x72x64xf32> to vector<72x64xf32>
    %cst_36 = arith.constant dense<0.000000e+00> : vector<8x64xf32>
    %36 = tpu.matmul %30, %35, %cst_36 {dimension_numbers = #tpu.dot_dimension_numbers<[1], [0], [0], [1], [0, 0, 1, 1], [], []>} : vector<8x72xf32>, vector<72x64xf32>, vector<8x64xf32> -> vector<8x64xf32>
    %c0_37 = arith.constant 0 : index
    %c1_38 = arith.constant 1 : index
    %c0_39 = arith.constant 0 : index
    %37 = vector.load %arg1[%c0_37, %c1_38, %c0_39] : memref<1x9x72xf32, #tpu.memory_space<vmem>>, vector<1x8x72xf32>
    %38 = vector.shape_cast %37 : vector<1x8x72xf32> to vector<8x72xf32>
    %c2_40 = arith.constant 2 : index
    %c0_41 = arith.constant 0 : index
    %c0_42 = arith.constant 0 : index
    %39 = vector.load %arg3[%c2_40, %c0_41, %c0_42] : memref<6x72x64xf32, #tpu.memory_space<vmem>>, vector<1x72x64xf32>
    %40 = vector.shape_cast %39 : vector<1x72x64xf32> to vector<72x64xf32>
    %cst_43 = arith.constant dense<0.000000e+00> : vector<8x64xf32>
    %41 = tpu.matmul %38, %40, %cst_43 {dimension_numbers = #tpu.dot_dimension_numbers<[1], [0], [0], [1], [0, 0, 1, 1], [], []>} : vector<8x72xf32>, vector<72x64xf32>, vector<8x64xf32> -> vector<8x64xf32>
    %42 = arith.addf %33, %41 : vector<8x64xf32>
    %c3_44 = arith.constant 3 : index
    %c0_45 = arith.constant 0 : index
    %c0_46 = arith.constant 0 : index
    %43 = vector.load %arg3[%c3_44, %c0_45, %c0_46] : memref<6x72x64xf32, #tpu.memory_space<vmem>>, vector<1x72x64xf32>
    %44 = vector.shape_cast %43 : vector<1x72x64xf32> to vector<72x64xf32>
    %cst_47 = arith.constant dense<0.000000e+00> : vector<8x64xf32>
    %45 = tpu.matmul %38, %44, %cst_47 {dimension_numbers = #tpu.dot_dimension_numbers<[1], [0], [0], [1], [0, 0, 1, 1], [], []>} : vector<8x72xf32>, vector<72x64xf32>, vector<8x64xf32> -> vector<8x64xf32>
    %46 = arith.addf %36, %45 : vector<8x64xf32>
    %c0_48 = arith.constant 0 : index
    %c1_49 = arith.constant 1 : index
    %c0_50 = arith.constant 0 : index
    %47 = vector.load %arg2[%c0_48, %c1_49, %c0_50] : memref<1x9x72xf32, #tpu.memory_space<vmem>>, vector<1x8x72xf32>
    %48 = vector.shape_cast %47 : vector<1x8x72xf32> to vector<8x72xf32>
    %c4_51 = arith.constant 4 : index
    %c0_52 = arith.constant 0 : index
    %c0_53 = arith.constant 0 : index
    %49 = vector.load %arg3[%c4_51, %c0_52, %c0_53] : memref<6x72x64xf32, #tpu.memory_space<vmem>>, vector<1x72x64xf32>
    %50 = vector.shape_cast %49 : vector<1x72x64xf32> to vector<72x64xf32>
    %cst_54 = arith.constant dense<0.000000e+00> : vector<8x64xf32>
    %51 = tpu.matmul %48, %50, %cst_54 {dimension_numbers = #tpu.dot_dimension_numbers<[1], [0], [0], [1], [0, 0, 1, 1], [], []>} : vector<8x72xf32>, vector<72x64xf32>, vector<8x64xf32> -> vector<8x64xf32>
    %52 = arith.addf %42, %51 : vector<8x64xf32>
    %c5_55 = arith.constant 5 : index
    %c0_56 = arith.constant 0 : index
    %c0_57 = arith.constant 0 : index
    %53 = vector.load %arg3[%c5_55, %c0_56, %c0_57] : memref<6x72x64xf32, #tpu.memory_space<vmem>>, vector<1x72x64xf32>
    %54 = vector.shape_cast %53 : vector<1x72x64xf32> to vector<72x64xf32>
    %cst_58 = arith.constant dense<0.000000e+00> : vector<8x64xf32>
    %55 = tpu.matmul %48, %54, %cst_58 {dimension_numbers = #tpu.dot_dimension_numbers<[1], [0], [0], [1], [0, 0, 1, 1], [], []>} : vector<8x72xf32>, vector<72x64xf32>, vector<8x64xf32> -> vector<8x64xf32>
    %56 = arith.addf %46, %55 : vector<8x64xf32>
    %57 = arith.maximumf %52, %56 : vector<8x64xf32>
    %58 = arith.maximumf %28, %57 : vector<8x64xf32>
    %c0_59 = arith.constant 0 : index
    %c0_60 = arith.constant 0 : index
    %59 = vector.load %arg4[%c0_59, %c0_60] : memref<1x64xf32, #tpu.memory_space<vmem>>, vector<1x64xf32>
    %60 = vector.broadcast %59 : vector<1x64xf32> to vector<8x64xf32>
    %61 = arith.addf %58, %60 : vector<8x64xf32>
    %cst_61 = arith.constant 0.000000e+00 : f32
    %62 = vector.broadcast %cst_61 : f32 to vector<8x64xf32>
    %63 = arith.maximumf %61, %62 : vector<8x64xf32>
    %c0_62 = arith.constant 0 : index
    %c0_63 = arith.constant 0 : index
    %64 = vector.load %arg8[%c0_62, %c0_63] : memref<8x64xf32, #tpu.memory_space<vmem>>, vector<8x64xf32>
    tpu.vector_store %arg8[%c0_62, %c0_63], %63 {strides = array<i32>} : memref<8x64xf32, #tpu.memory_space<vmem>>, vector<8x64xf32>,
    %c0_64 = arith.constant 0 : index
    %c0_65 = arith.constant 0 : index
    %65 = vector.load %arg8[%c0_64, %c0_65] : memref<8x64xf32, #tpu.memory_space<vmem>>, vector<1x64xf32>
    %c0_66 = arith.constant 0 : index
    %c0_67 = arith.constant 0 : index
    %66 = vector.load %arg9[%c0_66, %c0_67] : memref<1x512xf32, #tpu.memory_space<vmem>>, vector<1x64xf32>
    tpu.vector_store %arg9[%c0_66, %c0_67], %65 {strides = array<i32>} : memref<1x512xf32, #tpu.memory_space<vmem>>, vector<1x64xf32>,
    %c1_68 = arith.constant 1 : index
    %c0_69 = arith.constant 0 : index
    %67 = vector.load %arg8[%c1_68, %c0_69] : memref<8x64xf32, #tpu.memory_space<vmem>>, vector<1x64xf32>
    %c0_70 = arith.constant 0 : index
    %c64 = arith.constant 64 : index
    %68 = vector.load %arg9[%c0_70, %c64] : memref<1x512xf32, #tpu.memory_space<vmem>>, vector<1x64xf32>
    tpu.vector_store %arg9[%c0_70, %c64], %67 {strides = array<i32>} : memref<1x512xf32, #tpu.memory_space<vmem>>, vector<1x64xf32>,
    %c2_71 = arith.constant 2 : index
    %c0_72 = arith.constant 0 : index
    %69 = vector.load %arg8[%c2_71, %c0_72] : memref<8x64xf32, #tpu.memory_space<vmem>>, vector<1x64xf32>
    %c0_73 = arith.constant 0 : index
    %c128 = arith.constant 128 : index
    %70 = vector.load %arg9[%c0_73, %c128] : memref<1x512xf32, #tpu.memory_space<vmem>>, vector<1x64xf32>
    tpu.vector_store %arg9[%c0_73, %c128], %69 {strides = array<i32>} : memref<1x512xf32, #tpu.memory_space<vmem>>, vector<1x64xf32>,
    %c3_74 = arith.constant 3 : index
    %c0_75 = arith.constant 0 : index
    %71 = vector.load %arg8[%c3_74, %c0_75] : memref<8x64xf32, #tpu.memory_space<vmem>>, vector<1x64xf32>
    %c0_76 = arith.constant 0 : index
    %c192 = arith.constant 192 : index
    %72 = vector.load %arg9[%c0_76, %c192] : memref<1x512xf32, #tpu.memory_space<vmem>>, vector<1x64xf32>
    tpu.vector_store %arg9[%c0_76, %c192], %71 {strides = array<i32>} : memref<1x512xf32, #tpu.memory_space<vmem>>, vector<1x64xf32>,
    %c4_77 = arith.constant 4 : index
    %c0_78 = arith.constant 0 : index
    %73 = vector.load %arg8[%c4_77, %c0_78] : memref<8x64xf32, #tpu.memory_space<vmem>>, vector<1x64xf32>
    %c0_79 = arith.constant 0 : index
    %c256 = arith.constant 256 : index
    %74 = vector.load %arg9[%c0_79, %c256] : memref<1x512xf32, #tpu.memory_space<vmem>>, vector<1x64xf32>
    tpu.vector_store %arg9[%c0_79, %c256], %73 {strides = array<i32>} : memref<1x512xf32, #tpu.memory_space<vmem>>, vector<1x64xf32>,
    %c5_80 = arith.constant 5 : index
    %c0_81 = arith.constant 0 : index
    %75 = vector.load %arg8[%c5_80, %c0_81] : memref<8x64xf32, #tpu.memory_space<vmem>>, vector<1x64xf32>
    %c0_82 = arith.constant 0 : index
    %c320 = arith.constant 320 : index
    %76 = vector.load %arg9[%c0_82, %c320] : memref<1x512xf32, #tpu.memory_space<vmem>>, vector<1x64xf32>
    tpu.vector_store %arg9[%c0_82, %c320], %75 {strides = array<i32>} : memref<1x512xf32, #tpu.memory_space<vmem>>, vector<1x64xf32>,
    %c6 = arith.constant 6 : index
    %c0_83 = arith.constant 0 : index
    %77 = vector.load %arg8[%c6, %c0_83] : memref<8x64xf32, #tpu.memory_space<vmem>>, vector<1x64xf32>
    %c0_84 = arith.constant 0 : index
    %c384 = arith.constant 384 : index
    %78 = vector.load %arg9[%c0_84, %c384] : memref<1x512xf32, #tpu.memory_space<vmem>>, vector<1x64xf32>
    tpu.vector_store %arg9[%c0_84, %c384], %77 {strides = array<i32>} : memref<1x512xf32, #tpu.memory_space<vmem>>, vector<1x64xf32>,
    %c7 = arith.constant 7 : index
    %c0_85 = arith.constant 0 : index
    %79 = vector.load %arg8[%c7, %c0_85] : memref<8x64xf32, #tpu.memory_space<vmem>>, vector<1x64xf32>
    %c0_86 = arith.constant 0 : index
    %c448 = arith.constant 448 : index
    %80 = vector.load %arg9[%c0_86, %c448] : memref<1x512xf32, #tpu.memory_space<vmem>>, vector<1x64xf32>
    tpu.vector_store %arg9[%c0_86, %c448], %79 {strides = array<i32>} : memref<1x512xf32, #tpu.memory_space<vmem>>, vector<1x64xf32>,
    %c0_87 = arith.constant 0 : index
    %c0_88 = arith.constant 0 : index
    %81 = vector.load %arg9[%c0_87, %c0_88] : memref<1x512xf32, #tpu.memory_space<vmem>>, vector<1x512xf32>
    %c0_89 = arith.constant 0 : index
    %c0_90 = arith.constant 0 : index
    %82 = vector.load %arg5[%c0_89, %c0_90] : memref<512x32xf32, #tpu.memory_space<vmem>>, vector<512x32xf32>
    %cst_91 = arith.constant dense<0.000000e+00> : vector<1x32xf32>
    %83 = tpu.matmul %81, %82, %cst_91 {dimension_numbers = #tpu.dot_dimension_numbers<[1], [0], [0], [1], [0, 0, 1, 1], [], []>} : vector<1x512xf32>, vector<512x32xf32>, vector<1x32xf32> -> vector<1x32xf32>
    %c0_92 = arith.constant 0 : index
    %c0_93 = arith.constant 0 : index
    %84 = vector.load %arg6[%c0_92, %c0_93] : memref<1x32xf32, #tpu.memory_space<vmem>>, vector<1x32xf32>
    %85 = arith.addf %83, %84 : vector<1x32xf32>
    %cst_94 = arith.constant 0.000000e+00 : f32
    %86 = vector.broadcast %cst_94 : f32 to vector<1x32xf32>
    %87 = arith.maximumf %85, %86 : vector<1x32xf32>
    %c0_95 = arith.constant 0 : index
    %c0_96 = arith.constant 0 : index
    %c0_97 = arith.constant 0 : index
    %88 = vector.load %arg7[%c0_95, %c0_96, %c0_97] : memref<1x1x32xf32, #tpu.memory_space<vmem>>, vector<1x1x32xf32>
    %89 = vector.shape_cast %88 : vector<1x1x32xf32> to vector<1x32xf32>
    %90 = vector.shape_cast %87 : vector<1x32xf32> to vector<1x1x32xf32>
    tpu.vector_store %arg7[%c0_95, %c0_96, %c0_97], %90 {strides = array<i32>} : memref<1x1x32xf32, #tpu.memory_space<vmem>>, vector<1x1x32xf32>,
    return
  }
  func.func @transform_0(%arg0: i32) -> (i32, i32, i32) {
    %c0_i32 = arith.constant 0 : i32
    %c0_i32_0 = arith.constant 0 : i32
    %c0_i32_1 = arith.constant 0 : i32
    return %arg0, %c0_i32, %c0_i32_0 : i32, i32, i32
  }
  func.func @transform_1(%arg0: i32) -> (i32, i32, i32) {
    %c0_i32 = arith.constant 0 : i32
    %c0_i32_0 = arith.constant 0 : i32
    %c0_i32_1 = arith.constant 0 : i32
    return %arg0, %c0_i32, %c0_i32_0 : i32, i32, i32
  }
  func.func @transform_2(%arg0: i32) -> (i32, i32, i32) {
    %c0_i32 = arith.constant 0 : i32
    %c0_i32_0 = arith.constant 0 : i32
    %c0_i32_1 = arith.constant 0 : i32
    %c0_i32_2 = arith.constant 0 : i32
    return %c0_i32, %c0_i32_0, %c0_i32_1 : i32, i32, i32
  }
  func.func @transform_3(%arg0: i32) -> (i32, i32) {
    %c0_i32 = arith.constant 0 : i32
    %c0_i32_0 = arith.constant 0 : i32
    %c0_i32_1 = arith.constant 0 : i32
    return %c0_i32, %c0_i32_0 : i32, i32
  }
  func.func @transform_4(%arg0: i32) -> (i32, i32) {
    %c0_i32 = arith.constant 0 : i32
    %c0_i32_0 = arith.constant 0 : i32
    %c0_i32_1 = arith.constant 0 : i32
    return %c0_i32, %c0_i32_0 : i32, i32
  }
  func.func @transform_5(%arg0: i32) -> (i32, i32) {
    %c0_i32 = arith.constant 0 : i32
    %c0_i32_0 = arith.constant 0 : i32
    %c0_i32_1 = arith.constant 0 : i32
    return %c0_i32, %c0_i32_0 : i32, i32
  }
  func.func @transform_6(%arg0: i32) -> (i32, i32, i32) {
    %c0_i32 = arith.constant 0 : i32
    %c0_i32_0 = arith.constant 0 : i32
    %c0_i32_1 = arith.constant 0 : i32
    return %arg0, %c0_i32, %c0_i32_0 : i32, i32, i32
  }
}

</mosaic_0001>

<llo_original>
// kernel: extractor_embeddings_forward.1
$region0: #{extractor_embeddings_forward.1}
  #allocation0 [shape = 'u32[]', space=smem, size = 0x4, offset = 0x4, fixed_abs, tag = 'smem constant byte address 0x4 - core index']
  #allocation1 [shape = 'u32[72,128]{1,0:T(1,128)}', space=vmem, size = 0x9000, scoped, tag = 'internal scratch']
  #allocation2 [shape = 'f32[8,64]{1,0:T(8,128)}', space=vmem, size = 0x1000, scoped, tag = 'scratch operand']
  #allocation3 [shape = 'f32[1,512]{1,0:T(1,128)}', space=vmem, size = 0x800, scoped, tag = 'scratch operand']
  %s0 = inlined_call_operand.vmem [shape: f32[2,9,72], index: 0, kind: input, shape index: {}]
  %s1 = inlined_call_operand.vmem [shape: f32[2,9,72], index: 1, kind: input, shape index: {}]
  %s2 = inlined_call_operand.vmem [shape: f32[6,72,64], index: 2, kind: input, shape index: {}]
  %s3 = inlined_call_operand.vmem [shape: f32[1,64], index: 3, kind: input, shape index: {}]
  %s4 = inlined_call_operand.vmem [shape: f32[512,32], index: 4, kind: input, shape index: {}]
  %s5 = inlined_call_operand.vmem [shape: f32[1,32], index: 5, kind: input, shape index: {}]
  %s6 = inlined_call_operand.hbm [shape: f32[2,1,32], index: 6, kind: output, shape index: {}]
  %s7 = sld [smem:[#allocation0]]
  $region57: #{extractor_embeddings_forward.1} parent=0
    _
  %s9 = ssub.s32 1, %s7
  %s10 = scalar_select 0, %s9, %s7
  $region1: #{extractor_embeddings_forward.1} parent=0
    #allocation4 [shape = 'u8[1024]{0}', space=vmem, size = 0x400, scoped, tag = 'output window, operand 0']
    #allocation5 [shape = 's32[2]{0}', space=sflag, size = 0x8, scoped, tag = 'scoped memory for extractor_embeddings_forward.1']
    %11 = vsyncpa [#allocation5], 0
    %s12 = scalar_lea.sflag [#allocation5], 1
    %13 = vsyncpa %s12, 0
    loop: start=0, step=1, limit=4
    $region2: #{extractor_embeddings_forward.1} parent=1 // loop_pre_header
      _
    $region3: #{extractor_embeddings_forward.1} parent=1 // loop_header
      %s15 = sphi 0, %s19
      %p16 = scmp.ge.s32.totalorder %s15, 4
      %s25 = sphi 0, %s27
      %s28 = sphi 0, %s25
      %s29 = sphi 0, %s28
      %s45 = sphi 0, %s29
      %s51 = sphi 0, %s53
      %s54 = sphi 0, %s51
      %s55 = sphi 0, %s54
      %s71 = sphi 0, %s55
      %s75 = sphi 0, %s75
      %s77 = sphi 0, %s75
      %s78 = sphi 0, %s77
      %s92 = sphi 0, %s78
      %s96 = sphi 0, %s96
      %s98 = sphi 0, %s96
      %s99 = sphi 0, %s98
      %s113 = sphi 0, %s99
      %s117 = sphi 0, %s117
      %s119 = sphi 0, %s117
      %s120 = sphi 0, %s119
      %s134 = sphi 0, %s120
      %s138 = sphi 0, %s138
      %s140 = sphi 0, %s138
      %s141 = sphi 0, %s140
      %s155 = sphi 0, %s141
      %s161 = sphi 0, %s163
      %s164 = sphi 0, %s161
      %s165 = sphi 0, %s164
      %s181 = sphi 0, %s165
    $region4: #{extractor_embeddings_forward.1} parent=1 // loop_header_branch
      %18 = sbr.rel (%p16) target = $region8
    $region5: #{extractor_embeddings_forward.1} parent=1 // loop_body
      %s20 = ssub.s32 %s15, 1
      %s21 = ssub.s32 %s15, 2
      %s22 = sadd.s32 %s15, 1
      %s23 = ssub.s32 %s15, %s22
      %p24 = scmp.eq.s32.totalorder %s23, 0
      %s26 = sadd.s32 %s25, 1
      %s27 = scalar_select %p24, %s25, %s26
      %p30 = pneg %p24
      %p31 = scmp.eq.s32.totalorder %s15, 1
      %p32 = por %p30, %p31
      %p33 = scmp.ne.s32.totalorder %s25, %s28
      %p34 = scmp.eq.s32.totalorder %s15, 0
      %p35 = por %p33, %p34
      %p36 = scmp.ne.s32.totalorder %s25, %s28
      %p37 = scmp.eq.s32.totalorder %s20, 1
      %p38 = por %p36, %p37
      %p39 = scmp.ne.s32.totalorder %s28, %s29
      %p40 = scmp.eq.s32.totalorder %s20, 0
      %p41 = por %p39, %p40
      %p42 = scmp.ne.s32.totalorder %s28, %s29
      %p43 = scmp.eq.s32.totalorder %s21, 1
      %p44 = por %p42, %p43
      %p46 = scmp.ne.s32.totalorder %s29, %s45
      %p47 = scmp.eq.s32.totalorder %s21, 0
      %p48 = por %p46, %p47
      %s49 = ssub.s32 %s15, %s22
      %p50 = scmp.eq.s32.totalorder %s49, 0
      %s52 = sadd.s32 %s51, 1
      %s53 = scalar_select %p50, %s51, %s52
      %p56 = pneg %p50
      %p57 = scmp.eq.s32.totalorder %s15, 1
      %p58 = por %p56, %p57
      %p59 = scmp.ne.s32.totalorder %s51, %s54
      %p60 = scmp.eq.s32.totalorder %s15, 0
      %p61 = por %p59, %p60
      %p62 = scmp.ne.s32.totalorder %s51, %s54
      %p63 = scmp.eq.s32.totalorder %s20, 1
      %p64 = por %p62, %p63
      %p65 = scmp.ne.s32.totalorder %s54, %s55
      %p66 = scmp.eq.s32.totalorder %s20, 0
      %p67 = por %p65, %p66
      %p68 = scmp.ne.s32.totalorder %s54, %s55
      %p69 = scmp.eq.s32.totalorder %s21, 1
      %p70 = por %p68, %p69
      %p72 = scmp.ne.s32.totalorder %s55, %s71
      %p73 = scmp.eq.s32.totalorder %s21, 0
      %p74 = por %p72, %p73
      %s76 = sadd.s32 %s75, 1
      %p79 = scmp.eq.s32.totalorder %s15, 1
      %p80 = scmp.ne.s32.totalorder %s75, %s77
      %p81 = scmp.eq.s32.totalorder %s15, 0
      %p82 = por %p80, %p81
      %p83 = scmp.ne.s32.totalorder %s75, %s77
      %p84 = scmp.eq.s32.totalorder %s20, 1
      %p85 = por %p83, %p84
      %p86 = scmp.ne.s32.totalorder %s77, %s78
      %p87 = scmp.eq.s32.totalorder %s20, 0
      %p88 = por %p86, %p87
      %p89 = scmp.ne.s32.totalorder %s77, %s78
      %p90 = scmp.eq.s32.totalorder %s21, 1
      %p91 = por %p89, %p90
      %p93 = scmp.ne.s32.totalorder %s78, %s92
      %p94 = scmp.eq.s32.totalorder %s21, 0
      %p95 = por %p93, %p94
      %s97 = sadd.s32 %s96, 1
      %p100 = scmp.eq.s32.totalorder %s15, 1
      %p101 = scmp.ne.s32.totalorder %s96, %s98
      %p102 = scmp.eq.s32.totalorder %s15, 0
      %p103 = por %p101, %p102
      %p104 = scmp.ne.s32.totalorder %s96, %s98
      %p105 = scmp.eq.s32.totalorder %s20, 1
      %p106 = por %p104, %p105
      %p107 = scmp.ne.s32.totalorder %s98, %s99
      %p108 = scmp.eq.s32.totalorder %s20, 0
      %p109 = por %p107, %p108
      %p110 = scmp.ne.s32.totalorder %s98, %s99
      %p111 = scmp.eq.s32.totalorder %s21, 1
      %p112 = por %p110, %p111
      %p114 = scmp.ne.s32.totalorder %s99, %s113
      %p115 = scmp.eq.s32.totalorder %s21, 0
      %p116 = por %p114, %p115
      %s118 = sadd.s32 %s117, 1
      %p121 = scmp.eq.s32.totalorder %s15, 1
      %p122 = scmp.ne.s32.totalorder %s117, %s119
      %p123 = scmp.eq.s32.totalorder %s15, 0
      %p124 = por %p122, %p123
      %p125 = scmp.ne.s32.totalorder %s117, %s119
      %p126 = scmp.eq.s32.totalorder %s20, 1
      %p127 = por %p125, %p126
      %p128 = scmp.ne.s32.totalorder %s119, %s120
      %p129 = scmp.eq.s32.totalorder %s20, 0
      %p130 = por %p128, %p129
      %p131 = scmp.ne.s32.totalorder %s119, %s120
      %p132 = scmp.eq.s32.totalorder %s21, 1
      %p133 = por %p131, %p132
      %p135 = scmp.ne.s32.totalorder %s120, %s134
      %p136 = scmp.eq.s32.totalorder %s21, 0
      %p137 = por %p135, %p136
      %s139 = sadd.s32 %s138, 1
      %p142 = scmp.eq.s32.totalorder %s15, 1
      %p143 = scmp.ne.s32.totalorder %s138, %s140
      %p144 = scmp.eq.s32.totalorder %s15, 0
      %p145 = por %p143, %p144
      %p146 = scmp.ne.s32.totalorder %s138, %s140
      %p147 = scmp.eq.s32.totalorder %s20, 1
      %p148 = por %p146, %p147
      %p149 = scmp.ne.s32.totalorder %s140, %s141
      %p150 = scmp.eq.s32.totalorder %s20, 0
      %p151 = por %p149, %p150
      %p152 = scmp.ne.s32.totalorder %s140, %s141
      %p153 = scmp.eq.s32.totalorder %s21, 1
      %p154 = por %p152, %p153
      %p156 = scmp.ne.s32.totalorder %s141, %s155
      %p157 = scmp.eq.s32.totalorder %s21, 0
      %p158 = por %p156, %p157
      %s159 = ssub.s32 %s15, %s22
      %p160 = scmp.eq.s32.totalorder %s159, 0
      %s162 = sadd.s32 %s161, 1
      %s163 = scalar_select %p160, %s161, %s162
      %p166 = pneg %p160
      %p167 = scmp.eq.s32.totalorder %s15, 1
      %p168 = por %p166, %p167
      %p169 = scmp.ne.s32.totalorder %s161, %s164
      %p170 = scmp.eq.s32.totalorder %s15, 0
      %p171 = por %p169, %p170
      %p172 = scmp.ne.s32.totalorder %s161, %s164
      %p173 = scmp.eq.s32.totalorder %s20, 1
      %p174 = por %p172, %p173
      %p175 = scmp.ne.s32.totalorder %s164, %s165
      %p176 = scmp.eq.s32.totalorder %s20, 0
      %p177 = por %p175, %p176
      %p178 = scmp.ne.s32.totalorder %s164, %s165
      %p179 = scmp.eq.s32.totalorder %s21, 1
      %p180 = por %p178, %p179
      %p182 = scmp.ne.s32.totalorder %s165, %s181
      %p183 = scmp.eq.s32.totalorder %s21, 0
      %p184 = por %p182, %p183
      %p185 = scmp.le.s32.totalorder 1, %s15
      %p186 = scmp.lt.s32.totalorder %s15, 3
      %p187 = pnand %p185, %p186
      %p188 = pneg %p187
      // Predicated region
      $region9: #{extractor_embeddings_forward.1} parent=5 // pred_check
        _
      $region10: #{extractor_embeddings_forward.1} parent=5 // pred_check_branch
        %190 = sbr.rel (%p187) target = $region12
      $region11: #{extractor_embeddings_forward.1} parent=5 // pred_region
        %s191 = ssub.s32 %s15, 1
        // Predicated region
        $region13: #{extractor_embeddings_forward.1} parent=11 // pred_check
          %p192 = pneg %p88
        $region14: #{extractor_embeddings_forward.1} parent=11 // pred_check_branch
          %194 = sbr.rel (%p192) target = $region16
        $region15: #{extractor_embeddings_forward.1} parent=11 // pred_region
          _
        $region16: #{extractor_embeddings_forward.1} parent=11 // pred_fallthru
          _
        // Predicated region
        $region17: #{extractor_embeddings_forward.1} parent=11 // pred_check
          %p195 = pneg %p109
        $region18: #{extractor_embeddings_forward.1} parent=11 // pred_check_branch
          %197 = sbr.rel (%p195) target = $region20
        $region19: #{extractor_embeddings_forward.1} parent=11 // pred_region
          _
        $region20: #{extractor_embeddings_forward.1} parent=11 // pred_fallthru
          _
        // Predicated region
        $region21: #{extractor_embeddings_forward.1} parent=11 // pred_check
          %p198 = pneg %p130
        $region22: #{extractor_embeddings_forward.1} parent=11 // pred_check_branch
          %200 = sbr.rel (%p198) target = $region24
        $region23: #{extractor_embeddings_forward.1} parent=11 // pred_region
          _
        $region24: #{extractor_embeddings_forward.1} parent=11 // pred_fallthru
          _
        // Predicated region
        $region25: #{extractor_embeddings_forward.1} parent=11 // pred_check
          %p201 = pneg %p151
        $region26: #{extractor_embeddings_forward.1} parent=11 // pred_check_branch
          %203 = sbr.rel (%p201) target = $region28
        $region27: #{extractor_embeddings_forward.1} parent=11 // pred_region
          _
        $region28: #{extractor_embeddings_forward.1} parent=11 // pred_fallthru
          _
      $region12: #{extractor_embeddings_forward.1} parent=5 // pred_fallthru
        _
      %p204 = scmp.lt.s32.totalorder %s15, 2
      // Predicated region
      $region29: #{extractor_embeddings_forward.1} parent=5 // pred_check
        %p205 = pneg %p204
      $region30: #{extractor_embeddings_forward.1} parent=5 // pred_check_branch
        %207 = sbr.rel (%p205) target = $region32
      $region31: #{extractor_embeddings_forward.1} parent=5 // pred_region
        // Predicated region
        $region33: #{extractor_embeddings_forward.1} parent=31 // pred_check
          %p208 = pneg %p35
        $region34: #{extractor_embeddings_forward.1} parent=31 // pred_check_branch
          %210 = sbr.rel (%p208) target = $region36
        $region35: #{extractor_embeddings_forward.1} parent=31 // pred_region
          %p211 = scmp.lt.s32.totalorder %s15, 1
          %s212 = scalar_select %p211, %s15, 1
          %s213 = smul.addr %s212, 2
          %s214 = smul.addr %s213, 8
          %s215 = scalar_lea.vmem %s0, %s214
        $region36: #{extractor_embeddings_forward.1} parent=31 // pred_fallthru
          _
        // Predicated region
        $region37: #{extractor_embeddings_forward.1} parent=31 // pred_check
          %p216 = pneg %p61
        $region38: #{extractor_embeddings_forward.1} parent=31 // pred_check_branch
          %218 = sbr.rel (%p216) target = $region40
        $region39: #{extractor_embeddings_forward.1} parent=31 // pred_region
          %p219 = scmp.lt.s32.totalorder %s15, 1
          %s220 = scalar_select %p219, %s15, 1
          %s221 = smul.addr %s220, 2
          %s222 = smul.addr %s221, 8
          %s223 = scalar_lea.vmem %s1, %s222
        $region40: #{extractor_embeddings_forward.1} parent=31 // pred_fallthru
          _
      $region32: #{extractor_embeddings_forward.1} parent=5 // pred_fallthru
        _
      %p224 = scmp.le.s32.totalorder 1, %s15
      %p225 = scmp.lt.s32.totalorder %s15, 3
      %p226 = pnand %p224, %p225
      %p227 = pneg %p226
      // Predicated region
      $region41: #{extractor_embeddings_forward.1} parent=5 // pred_check
        _
      $region42: #{extractor_embeddings_forward.1} parent=5 // pred_check_branch
        %229 = sbr.rel (%p226) target = $region44
      $region43: #{extractor_embeddings_forward.1} parent=5 // pred_region
        %s230 = ssub.s32 %s15, 1
        %p231 = scmp.lt.s32.totalorder %s20, 1
        %s232 = scalar_select %p231, %s20, 1
        %s233 = smul.addr %s232, 2
        %s234 = smul.addr %s233, 8
        %s235 = scalar_lea.vmem %s0, %s234
        %p236 = pneg %p41
        %p237 = pneg %p38
        %p238 = scmp.lt.s32.totalorder %s20, 1
        %s239 = scalar_select %p238, %s20, 1
        %s240 = smul.addr %s239, 2
        %s241 = smul.addr %s240, 8
        %s242 = scalar_lea.vmem %s1, %s241
        %p243 = pneg %p67
        %p244 = pneg %p64
        %p245 = pneg %p88
        %p246 = pneg %p85
        %p247 = pneg %p109
        %p248 = pneg %p106
        %p249 = pneg %p130
        %p250 = pneg %p127
        %p251 = pneg %p151
        %p252 = pneg %p148
        %p253 = pneg %p177
        %p254 = pneg %p174
        %s255 = sand.u32 %s164, 1
        %s256 = scalar_lea.sflag [#allocation5], %s255
        %s257 = sand.u32 %s164, 1
        %s258 = scalar_lea.vmem [#allocation4], %s257
        %p259 = scmp.lt.s32.totalorder %s20, 1
        %s260 = scalar_select %p259, %s20, 1
        %s261 = smul.addr %s260, 2
        %s262 = smul.addr %s261, 8
        %s263 = scalar_lea.vmem %s0, %s262
        %p264 = scmp.lt.s32.totalorder %s20, 1
        %s265 = scalar_select %p264, %s20, 1
        %s266 = smul.addr %s265, 2
        %s267 = smul.addr %s266, 8
        %s268 = scalar_lea.vmem %s1, %s267
        %v269 = vld [vmem:[%s263] sm:$0xff]
        %v270 = vld [vmem:[%s2] sm:$0xff]
        %v271 = vld [vmem:[%s2 + $0x8] sm:$0xff]
        %v272 = vld [vmem:[%s2 + $0x10] sm:$0xff]
        %v273 = vld [vmem:[%s2 + $0x18] sm:$0xff]
        %v274 = vld [vmem:[%s2 + $0x20] sm:$0xff]
        %v275 = vld [vmem:[%s2 + $0x28] sm:$0xff]
        %v276 = vld [vmem:[%s2 + $0x30] sm:$0xff]
        %v277 = vld [vmem:[%s2 + $0x38] sm:$0xff]
        %v278 = vld [vmem:[%s2 + $0x40] sm:$0xff]
        %s279 = scalar_lea.vmem %s2, 72
        %v280 = vld [vmem:[%s279] sm:$0xff]
        %v281 = vld [vmem:[%s279 + $0x8] sm:$0xff]
        %v282 = vld [vmem:[%s279 + $0x10] sm:$0xff]
        %v283 = vld [vmem:[%s279 + $0x18] sm:$0xff]
        %v284 = vld [vmem:[%s279 + $0x20] sm:$0xff]
        %v285 = vld [vmem:[%s279 + $0x28] sm:$0xff]
        %v286 = vld [vmem:[%s279 + $0x30] sm:$0xff]
        %v287 = vld [vmem:[%s279 + $0x38] sm:$0xff]
        %v288 = vld [vmem:[%s279 + $0x40] sm:$0xff]
        %v289 = vld [vmem:[%s268] sm:$0xff]
        %s290 = scalar_lea.vmem %s2, 144
        %v291 = vld [vmem:[%s290] sm:$0xff]
        %v292 = vld [vmem:[%s290 + $0x8] sm:$0xff]
        %v293 = vld [vmem:[%s290 + $0x10] sm:$0xff]
        %v294 = vld [vmem:[%s290 + $0x18] sm:$0xff]
        %v295 = vld [vmem:[%s290 + $0x20] sm:$0xff]
        %v296 = vld [vmem:[%s290 + $0x28] sm:$0xff]
        %v297 = vld [vmem:[%s290 + $0x30] sm:$0xff]
        %v298 = vld [vmem:[%s290 + $0x38] sm:$0xff]
        %v299 = vld [vmem:[%s290 + $0x40] sm:$0xff]
        %vm300 = vcmask 588800
        %v302 = vsel %vm300, %v289, 0
        %304 = vmatpush.msra.mxu0 0.0
        %305 = vmatpush.msra.mxu0 0.0
        %306 = vmatpush.msra.mxu0 0.0
        %307 = vmatpush.msra.mxu0 0.0
        %308 = vmatpush.msra.mxu0 0.0
        %309 = vmatpush.msra.mxu0 0.0
        %310 = vmatpush.msra.mxu0 0.0
        %311 = vmatpush.msra.mxu0 %v299
        %312 = vmatpush.msra.mxu0 %v298
        %313 = vmatpush.msra.mxu0 %v297
        %314 = vmatpush.msra.mxu0 %v296
        %315 = vmatpush.msra.mxu0 %v295
        %316 = vmatpush.msra.mxu0 %v294
        %317 = vmatpush.msra.mxu0 %v293
        %318 = vmatpush.msra.mxu0 %v292
        %319 = vmatpush.msra.mxu0 %v291
        %320 = vmatmul.f32.gmra.mxu0 %v302
        %v321 = vpop.f32.mrf.mxu0
        %v322 = vadd.f32 0.0, %v321
        %323 = vdwg.mxu0
        %v325 = vsel %vm300, %v269, 0
        %327 = vmatpush.msra.mxu0 0.0
        %328 = vmatpush.msra.mxu0 0.0
        %329 = vmatpush.msra.mxu0 0.0
        %330 = vmatpush.msra.mxu0 0.0
        %331 = vmatpush.msra.mxu0 0.0
        %332 = vmatpush.msra.mxu0 0.0
        %333 = vmatpush.msra.mxu0 0.0
        %334 = vmatpush.msra.mxu0 %v278
        %335 = vmatpush.msra.mxu0 %v277
        %336 = vmatpush.msra.mxu0 %v276
        %337 = vmatpush.msra.mxu0 %v275
        %338 = vmatpush.msra.mxu0 %v274
        %339 = vmatpush.msra.mxu0 %v273
        %340 = vmatpush.msra.mxu0 %v272
        %341 = vmatpush.msra.mxu0 %v271
        %342 = vmatpush.msra.mxu0 %v270
        %343 = vmatmul.f32.gmra.mxu0 %v325
        %v344 = vpop.f32.mrf.mxu0
        %v345 = vadd.f32 %v322, %v344
        %346 = vdwg.mxu0
        %s347 = scalar_lea.vmem %s2, 216
        %v348 = vld [vmem:[%s347] sm:$0xff]
        %v349 = vld [vmem:[%s347 + $0x8] sm:$0xff]
        %v350 = vld [vmem:[%s347 + $0x10] sm:$0xff]
        %v351 = vld [vmem:[%s347 + $0x18] sm:$0xff]
        %v352 = vld [vmem:[%s347 + $0x20] sm:$0xff]
        %v353 = vld [vmem:[%s347 + $0x28] sm:$0xff]
        %v354 = vld [vmem:[%s347 + $0x30] sm:$0xff]
        %v355 = vld [vmem:[%s347 + $0x38] sm:$0xff]
        %v356 = vld [vmem:[%s347 + $0x40] sm:$0xff]
        %357 = vmatpush.msra.mxu0 0.0
        %358 = vmatpush.msra.mxu0 0.0
        %359 = vmatpush.msra.mxu0 0.0
        %360 = vmatpush.msra.mxu0 0.0
        %361 = vmatpush.msra.mxu0 0.0
        %362 = vmatpush.msra.mxu0 0.0
        %363 = vmatpush.msra.mxu0 0.0
        %364 = vmatpush.msra.mxu0 %v356
        %365 = vmatpush.msra.mxu0 %v355
        %366 = vmatpush.msra.mxu0 %v354
        %367 = vmatpush.msra.mxu0 %v353
        %368 = vmatpush.msra.mxu0 %v352
        %369 = vmatpush.msra.mxu0 %v351
        %370 = vmatpush.msra.mxu0 %v350
        %371 = vmatpush.msra.mxu0 %v349
        %372 = vmatpush.msra.mxu0 %v348
        %373 = vmatmul.f32.gmra.mxu0 %v302
        %v374 = vpop.f32.mrf.mxu0
        %v375 = vadd.f32 0.0, %v374
        %376 = vdwg.mxu0
        %377 = vmatpush.msra.mxu0 0.0
        %378 = vmatpush.msra.mxu0 0.0
        %379 = vmatpush.msra.mxu0 0.0
        %380 = vmatpush.msra.mxu0 0.0
        %381 = vmatpush.msra.mxu0 0.0
        %382 = vmatpush.msra.mxu0 0.0
        %383 = vmatpush.msra.mxu0 0.0
        %384 = vmatpush.msra.mxu0 %v288
        %385 = vmatpush.msra.mxu0 %v287
        %386 = vmatpush.msra.mxu0 %v286
        %387 = vmatpush.msra.mxu0 %v285
        %388 = vmatpush.msra.mxu0 %v284
        %389 = vmatpush.msra.mxu0 %v283
        %390 = vmatpush.msra.mxu0 %v282
        %391 = vmatpush.msra.mxu0 %v281
        %392 = vmatpush.msra.mxu0 %v280
        %393 = vmatmul.f32.gmra.mxu0 %v325
        %v394 = vpop.f32.mrf.mxu0
        %v395 = vadd.f32 %v375, %v394
        %396 = vdwg.mxu0
        %v397 = vld [vmem:[%s263 + $0x1] sm:$0xff]
        %s398 = scalar_lea.vmem %s2, 288
        %v399 = vld [vmem:[%s398] sm:$0xff]
        %v400 = vld [vmem:[%s398 + $0x8] sm:$0xff]
        %v401 = vld [vmem:[%s398 + $0x10] sm:$0xff]
        %v402 = vld [vmem:[%s398 + $0x18] sm:$0xff]
        %v403 = vld [vmem:[%s398 + $0x20] sm:$0xff]
        %v404 = vld [vmem:[%s398 + $0x28] sm:$0xff]
        %v405 = vld [vmem:[%s398 + $0x30] sm:$0xff]
        %v406 = vld [vmem:[%s398 + $0x38] sm:$0xff]
        %v407 = vld [vmem:[%s398 + $0x40] sm:$0xff]
        %v409 = vsel %vm300, %v397, 0
        %411 = vmatpush.msra.mxu0 0.0
        %412 = vmatpush.msra.mxu0 0.0
        %413 = vmatpush.msra.mxu0 0.0
        %414 = vmatpush.msra.mxu0 0.0
        %415 = vmatpush.msra.mxu0 0.0
        %416 = vmatpush.msra.mxu0 0.0
        %417 = vmatpush.msra.mxu0 0.0
        %418 = vmatpush.msra.mxu0 %v407
        %419 = vmatpush.msra.mxu0 %v406
        %420 = vmatpush.msra.mxu0 %v405
        %421 = vmatpush.msra.mxu0 %v404
        %422 = vmatpush.msra.mxu0 %v403
        %423 = vmatpush.msra.mxu0 %v402
        %424 = vmatpush.msra.mxu0 %v401
        %425 = vmatpush.msra.mxu0 %v400
        %426 = vmatpush.msra.mxu0 %v399
        %427 = vmatmul.f32.gmra.mxu0 %v409
        %v428 = vpop.f32.mrf.mxu0
        %v429 = vadd.f32 0.0, %v428
        %430 = vdwg.mxu0
        %v431 = vadd.f32 %v345, %v429
        %s432 = scalar_lea.vmem %s2, 360
        %v433 = vld [vmem:[%s432] sm:$0xff]
        %v434 = vld [vmem:[%s432 + $0x8] sm:$0xff]
        %v435 = vld [vmem:[%s432 + $0x10] sm:$0xff]
        %v436 = vld [vmem:[%s432 + $0x18] sm:$0xff]
        %v437 = vld [vmem:[%s432 + $0x20] sm:$0xff]
        %v438 = vld [vmem:[%s432 + $0x28] sm:$0xff]
        %v439 = vld [vmem:[%s432 + $0x30] sm:$0xff]
        %v440 = vld [vmem:[%s432 + $0x38] sm:$0xff]
        %v441 = vld [vmem:[%s432 + $0x40] sm:$0xff]
        %442 = vmatpush.msra.mxu0 0.0
        %443 = vmatpush.msra.mxu0 0.0
        %444 = vmatpush.msra.mxu0 0.0
        %445 = vmatpush.msra.mxu0 0.0
        %446 = vmatpush.msra.mxu0 0.0
        %447 = vmatpush.msra.mxu0 0.0
        %448 = vmatpush.msra.mxu0 0.0
        %449 = vmatpush.msra.mxu0 %v441
        %450 = vmatpush.msra.mxu0 %v440
        %451 = vmatpush.msra.mxu0 %v439
        %452 = vmatpush.msra.mxu0 %v438
        %453 = vmatpush.msra.mxu0 %v437
        %454 = vmatpush.msra.mxu0 %v436
        %455 = vmatpush.msra.mxu0 %v435
        %456 = vmatpush.msra.mxu0 %v434
        %457 = vmatpush.msra.mxu0 %v433
        %458 = vmatmul.f32.gmra.mxu0 %v409
        %v459 = vpop.f32.mrf.mxu0
        %v460 = vadd.f32 0.0, %v459
        %461 = vdwg.mxu0
        %v462 = vadd.f32 %v395, %v460
        %v463 = vmax.f32 %v431, %v462
        %464 = vmatpush.msra.mxu0 0.0
        %465 = vmatpush.msra.mxu0 0.0
        %466 = vmatpush.msra.mxu0 0.0
        %467 = vmatpush.msra.mxu0 0.0
        %468 = vmatpush.msra.mxu0 0.0
        %469 = vmatpush.msra.mxu0 0.0
        %470 = vmatpush.msra.mxu0 0.0
        %471 = vmatpush.msra.mxu0 %v299
        %472 = vmatpush.msra.mxu0 %v298
        %473 = vmatpush.msra.mxu0 %v297
        %474 = vmatpush.msra.mxu0 %v296
        %475 = vmatpush.msra.mxu0 %v295
        %476 = vmatpush.msra.mxu0 %v294
        %477 = vmatpush.msra.mxu0 %v293
        %478 = vmatpush.msra.mxu0 %v292
        %479 = vmatpush.msra.mxu0 %v291
        %480 = vmatmul.f32.gmra.mxu0 %v409
        %v481 = vpop.f32.mrf.mxu0
        %v482 = vadd.f32 0.0, %v481
        %483 = vdwg.mxu0
        %484 = vmatpush.msra.mxu0 0.0
        %485 = vmatpush.msra.mxu0 0.0
        %486 = vmatpush.msra.mxu0 0.0
        %487 = vmatpush.msra.mxu0 0.0
        %488 = vmatpush.msra.mxu0 0.0
        %489 = vmatpush.msra.mxu0 0.0
        %490 = vmatpush.msra.mxu0 0.0
        %491 = vmatpush.msra.mxu0 %v278
        %492 = vmatpush.msra.mxu0 %v277
        %493 = vmatpush.msra.mxu0 %v276
        %494 = vmatpush.msra.mxu0 %v275
        %495 = vmatpush.msra.mxu0 %v274
        %496 = vmatpush.msra.mxu0 %v273
        %497 = vmatpush.msra.mxu0 %v272
        %498 = vmatpush.msra.mxu0 %v271
        %499 = vmatpush.msra.mxu0 %v270
        %500 = vmatmul.f32.gmra.mxu0 %v302
        %v501 = vpop.f32.mrf.mxu0
        %v502 = vadd.f32 %v482, %v501
        %503 = vdwg.mxu0
        %504 = vmatpush.msra.mxu0 0.0
        %505 = vmatpush.msra.mxu0 0.0
        %506 = vmatpush.msra.mxu0 0.0
        %507 = vmatpush.msra.mxu0 0.0
        %508 = vmatpush.msra.mxu0 0.0
        %509 = vmatpush.msra.mxu0 0.0
        %510 = vmatpush.msra.mxu0 0.0
        %511 = vmatpush.msra.mxu0 %v356
        %512 = vmatpush.msra.mxu0 %v355
        %513 = vmatpush.msra.mxu0 %v354
        %514 = vmatpush.msra.mxu0 %v353
        %515 = vmatpush.msra.mxu0 %v352
        %516 = vmatpush.msra.mxu0 %v351
        %517 = vmatpush.msra.mxu0 %v350
        %518 = vmatpush.msra.mxu0 %v349
        %519 = vmatpush.msra.mxu0 %v348
        %520 = vmatmul.f32.gmra.mxu0 %v409
        %v521 = vpop.f32.mrf.mxu0
        %v522 = vadd.f32 0.0, %v521
        %523 = vdwg.mxu0
        %524 = vmatpush.msra.mxu0 0.0
        %525 = vmatpush.msra.mxu0 0.0
        %526 = vmatpush.msra.mxu0 0.0
        %527 = vmatpush.msra.mxu0 0.0
        %528 = vmatpush.msra.mxu0 0.0
        %529 = vmatpush.msra.mxu0 0.0
        %530 = vmatpush.msra.mxu0 0.0
        %531 = vmatpush.msra.mxu0 %v288
        %532 = vmatpush.msra.mxu0 %v287
        %533 = vmatpush.msra.mxu0 %v286
        %534 = vmatpush.msra.mxu0 %v285
        %535 = vmatpush.msra.mxu0 %v284
        %536 = vmatpush.msra.mxu0 %v283
        %537 = vmatpush.msra.mxu0 %v282
        %538 = vmatpush.msra.mxu0 %v281
        %539 = vmatpush.msra.mxu0 %v280
        %540 = vmatmul.f32.gmra.mxu0 %v302
        %v541 = vpop.f32.mrf.mxu0
        %v542 = vadd.f32 %v522, %v541
        %543 = vdwg.mxu0
        %v544 = vld [vmem:[%s268 + $0x1] sm:$0xff]
        %v546 = vsel %vm300, %v544, 0
        %548 = vmatpush.msra.mxu0 0.0
        %549 = vmatpush.msra.mxu0 0.0
        %550 = vmatpush.msra.mxu0 0.0
        %551 = vmatpush.msra.mxu0 0.0
        %552 = vmatpush.msra.mxu0 0.0
        %553 = vmatpush.msra.mxu0 0.0
        %554 = vmatpush.msra.mxu0 0.0
        %555 = vmatpush.msra.mxu0 %v407
        %556 = vmatpush.msra.mxu0 %v406
        %557 = vmatpush.msra.mxu0 %v405
        %558 = vmatpush.msra.mxu0 %v404
        %559 = vmatpush.msra.mxu0 %v403
        %560 = vmatpush.msra.mxu0 %v402
        %561 = vmatpush.msra.mxu0 %v401
        %562 = vmatpush.msra.mxu0 %v400
        %563 = vmatpush.msra.mxu0 %v399
        %564 = vmatmul.f32.gmra.mxu0 %v546
        %v565 = vpop.f32.mrf.mxu0
        %v566 = vadd.f32 0.0, %v565
        %567 = vdwg.mxu0
        %v568 = vadd.f32 %v502, %v566
        %569 = vmatpush.msra.mxu0 0.0
        %570 = vmatpush.msra.mxu0 0.0
        %571 = vmatpush.msra.mxu0 0.0
        %572 = vmatpush.msra.mxu0 0.0
        %573 = vmatpush.msra.mxu0 0.0
        %574 = vmatpush.msra.mxu0 0.0
        %575 = vmatpush.msra.mxu0 0.0
        %576 = vmatpush.msra.mxu0 %v441
        %577 = vmatpush.msra.mxu0 %v440
        %578 = vmatpush.msra.mxu0 %v439
        %579 = vmatpush.msra.mxu0 %v438
        %580 = vmatpush.msra.mxu0 %v437
        %581 = vmatpush.msra.mxu0 %v436
        %582 = vmatpush.msra.mxu0 %v435
        %583 = vmatpush.msra.mxu0 %v434
        %584 = vmatpush.msra.mxu0 %v433
        %585 = vmatmul.f32.gmra.mxu0 %v546
        %v586 = vpop.f32.mrf.mxu0
        %v587 = vadd.f32 0.0, %v586
        %588 = vdwg.mxu0
        %v589 = vadd.f32 %v542, %v587
        %v590 = vmax.f32 %v568, %v589
        %v591 = vmax.f32 %v463, %v590
        %v592 = vld [vmem:[%s3] sm:$0x1]
        %v594 = vperm.slane %v592, 0
        %v596 = vadd.f32 %v591, %v594
        %v597 = vmax.f32 %v596, 0.0
        %vm598 = vcmask 523264
        %599 = vst.msk [vmem:[#allocation2] sm:$0xff] %vm598, %v597
        %v600 = vld [vmem:[#allocation2] sm:$0x1]
        %v601 = vlaneseq
        %vm602 = vcmp.ge.s32.totalorder %v601, 0
        %vm603 = vcmp.lt.s32.totalorder %v601, 64
        %vm604 = vmand %vm602, %vm603
        %605 = vst.msk [vmem:[#allocation3] sm:$0x1] %vm604, %v600
        %v606 = vld [vmem:[#allocation2 + $0x1] sm:$0x1]
        %608 = vrot.lane.b32.xlu0 %v606, 64
        %v609 = vpop.permute.xlu0 %608
        %vm611 = vcmp.ge.s32.totalorder %v601, 64
        %vm612 = vcmp.lt.s32.totalorder %v601, 128
        %vm613 = vmand %vm611, %vm612
        %614 = vst.msk [vmem:[#allocation3] sm:$0x1] %vm613, %v609
        %v615 = vld [vmem:[#allocation2 + $0x2] sm:$0x1]
        %616 = vst.msk [vmem:[#allocation3 + $0x1] sm:$0x1] %vm604, %v615
        %v617 = vld [vmem:[#allocation2 + $0x3] sm:$0x1]
        %619 = vrot.lane.b32.xlu0 %v617, 64
        %v620 = vpop.permute.xlu0 %619
        %622 = vst.msk [vmem:[#allocation3 + $0x1] sm:$0x1] %vm613, %v620
        %v623 = vld [vmem:[#allocation2 + $0x4] sm:$0x1]
        %624 = vst.msk [vmem:[#allocation3 + $0x2] sm:$0x1] %vm604, %v623
        %v625 = vld [vmem:[#allocation2 + $0x5] sm:$0x1]
        %627 = vrot.lane.b32.xlu0 %v625, 64
        %v628 = vpop.permute.xlu0 %627
        %630 = vst.msk [vmem:[#allocation3 + $0x2] sm:$0x1] %vm613, %v628
        %v631 = vld [vmem:[#allocation2 + $0x6] sm:$0x1]
        %632 = vst.msk [vmem:[#allocation3 + $0x3] sm:$0x1] %vm604, %v631
        %v633 = vld [vmem:[#allocation2 + $0x7] sm:$0x1]
        %635 = vrot.lane.b32.xlu0 %v633, 64
        %v636 = vpop.permute.xlu0 %635
        %638 = vst.msk [vmem:[#allocation3 + $0x3] sm:$0x1] %vm613, %v636
        %v639 = vld [vmem:[#allocation3] sm:$0xf]
        %v640 = vld [vmem:[%s4] sm:$0xff]
        %v641 = vld [vmem:[%s4 + $0x8] sm:$0xff]
        %v642 = vld [vmem:[%s4 + $0x10] sm:$0xff]
        %v643 = vld [vmem:[%s4 + $0x18] sm:$0xff]
        %v644 = vld [vmem:[%s4 + $0x20] sm:$0xff]
        %v645 = vld [vmem:[%s4 + $0x28] sm:$0xff]
        %v646 = vld [vmem:[%s4 + $0x30] sm:$0xff]
        %v647 = vld [vmem:[%s4 + $0x38] sm:$0xff]
        %v648 = vld [vmem:[%s4 + $0x40] sm:$0xff]
        %v649 = vld [vmem:[%s4 + $0x48] sm:$0xff]
        %v650 = vld [vmem:[%s4 + $0x50] sm:$0xff]
        %v651 = vld [vmem:[%s4 + $0x58] sm:$0xff]
        %v652 = vld [vmem:[%s4 + $0x60] sm:$0xff]
        %v653 = vld [vmem:[%s4 + $0x68] sm:$0xff]
        %v654 = vld [vmem:[%s4 + $0x70] sm:$0xff]
        %v655 = vld [vmem:[%s4 + $0x78] sm:$0xff]
        %v656 = vld [vmem:[%s4 + $0x80] sm:$0xff]
        %v657 = vld [vmem:[%s4 + $0x88] sm:$0xff]
        %v658 = vld [vmem:[%s4 + $0x90] sm:$0xff]
        %v659 = vld [vmem:[%s4 + $0x98] sm:$0xff]
        %v660 = vld [vmem:[%s4 + $0xa0] sm:$0xff]
        %v661 = vld [vmem:[%s4 + $0xa8] sm:$0xff]
        %v662 = vld [vmem:[%s4 + $0xb0] sm:$0xff]
        %v663 = vld [vmem:[%s4 + $0xb8] sm:$0xff]
        %v664 = vld [vmem:[%s4 + $0xc0] sm:$0xff]
        %v665 = vld [vmem:[%s4 + $0xc8] sm:$0xff]
        %v666 = vld [vmem:[%s4 + $0xd0] sm:$0xff]
        %v667 = vld [vmem:[%s4 + $0xd8] sm:$0xff]
        %v668 = vld [vmem:[%s4 + $0xe0] sm:$0xff]
        %v669 = vld [vmem:[%s4 + $0xe8] sm:$0xff]
        %v670 = vld [vmem:[%s4 + $0xf0] sm:$0xff]
        %v671 = vld [vmem:[%s4 + $0xf8] sm:$0xff]
        %v672 = vld [vmem:[%s4 + $0x100] sm:$0xff]
        %v673 = vld [vmem:[%s4 + $0x108] sm:$0xff]
        %v674 = vld [vmem:[%s4 + $0x110] sm:$0xff]
        %v675 = vld [vmem:[%s4 + $0x118] sm:$0xff]
        %v676 = vld [vmem:[%s4 + $0x120] sm:$0xff]
        %v677 = vld [vmem:[%s4 + $0x128] sm:$0xff]
        %v678 = vld [vmem:[%s4 + $0x130] sm:$0xff]
        %v679 = vld [vmem:[%s4 + $0x138] sm:$0xff]
        %v680 = vld [vmem:[%s4 + $0x140] sm:$0xff]
        %v681 = vld [vmem:[%s4 + $0x148] sm:$0xff]
        %v682 = vld [vmem:[%s4 + $0x150] sm:$0xff]
        %v683 = vld [vmem:[%s4 + $0x158] sm:$0xff]
        %v684 = vld [vmem:[%s4 + $0x160] sm:$0xff]
        %v685 = vld [vmem:[%s4 + $0x168] sm:$0xff]
        %v686 = vld [vmem:[%s4 + $0x170] sm:$0xff]
        %v687 = vld [vmem:[%s4 + $0x178] sm:$0xff]
        %v688 = vld [vmem:[%s4 + $0x180] sm:$0xff]
        %v689 = vld [vmem:[%s4 + $0x188] sm:$0xff]
        %v690 = vld [vmem:[%s4 + $0x190] sm:$0xff]
        %v691 = vld [vmem:[%s4 + $0x198] sm:$0xff]
        %v692 = vld [vmem:[%s4 + $0x1a0] sm:$0xff]
        %v693 = vld [vmem:[%s4 + $0x1a8] sm:$0xff]
        %v694 = vld [vmem:[%s4 + $0x1b0] sm:$0xff]
        %v695 = vld [vmem:[%s4 + $0x1b8] sm:$0xff]
        %v696 = vld [vmem:[%s4 + $0x1c0] sm:$0xff]
        %v697 = vld [vmem:[%s4 + $0x1c8] sm:$0xff]
        %v698 = vld [vmem:[%s4 + $0x1d0] sm:$0xff]
        %v699 = vld [vmem:[%s4 + $0x1d8] sm:$0xff]
        %v700 = vld [vmem:[%s4 + $0x1e0] sm:$0xff]
        %v701 = vld [vmem:[%s4 + $0x1e8] sm:$0xff]
        %v702 = vld [vmem:[%s4 + $0x1f0] sm:$0xff]
        %v703 = vld [vmem:[%s4 + $0x1f8] sm:$0xff]
        %v704 = vld [vmem:[%s5] sm:$0x1]
        %v706 = vperm.slane %v639, 0
        %v707 = vperm.slane %v639, 1
        %v708 = vperm.slane %v639, 2
        %v709 = vperm.slane %v639, 3
        %714 = vmatpush.msra.mxu0 %v655
        %715 = vmatpush.msra.mxu0 %v654
        %716 = vmatpush.msra.mxu0 %v653
        %717 = vmatpush.msra.mxu0 %v652
        %718 = vmatpush.msra.mxu0 %v651
        %719 = vmatpush.msra.mxu0 %v650
        %720 = vmatpush.msra.mxu0 %v649
        %721 = vmatpush.msra.mxu0 %v648
        %722 = vmatpush.msra.mxu0 %v647
        %723 = vmatpush.msra.mxu0 %v646
        %724 = vmatpush.msra.mxu0 %v645
        %725 = vmatpush.msra.mxu0 %v644
        %726 = vmatpush.msra.mxu0 %v643
        %727 = vmatpush.msra.mxu0 %v642
        %728 = vmatpush.msra.mxu0 %v641
        %729 = vmatpush.msra.mxu0 %v640
        %730 = vmatmul.f32.gmra.mxu0 %v706
        %v731 = vpop.f32.mrf.mxu0
        %v732 = vadd.f32 %v704, %v731
        %733 = vdwg.mxu0
        %734 = vmatpush.msra.mxu0 %v671
        %735 = vmatpush.msra.mxu0 %v670
        %736 = vmatpush.msra.mxu0 %v669
        %737 = vmatpush.msra.mxu0 %v668
        %738 = vmatpush.msra.mxu0 %v667
        %739 = vmatpush.msra.mxu0 %v666
        %740 = vmatpush.msra.mxu0 %v665
        %741 = vmatpush.msra.mxu0 %v664
        %742 = vmatpush.msra.mxu0 %v663
        %743 = vmatpush.msra.mxu0 %v662
        %744 = vmatpush.msra.mxu0 %v661
        %745 = vmatpush.msra.mxu0 %v660
        %746 = vmatpush.msra.mxu0 %v659
        %747 = vmatpush.msra.mxu0 %v658
        %748 = vmatpush.msra.mxu0 %v657
        %749 = vmatpush.msra.mxu0 %v656
        %750 = vmatmul.f32.gmra.mxu0 %v707
        %v751 = vpop.f32.mrf.mxu0
        %v752 = vadd.f32 %v732, %v751
        %753 = vdwg.mxu0
        %754 = vmatpush.msra.mxu0 %v687
        %755 = vmatpush.msra.mxu0 %v686
        %756 = vmatpush.msra.mxu0 %v685
        %757 = vmatpush.msra.mxu0 %v684
        %758 = vmatpush.msra.mxu0 %v683
        %759 = vmatpush.msra.mxu0 %v682
        %760 = vmatpush.msra.mxu0 %v681
        %761 = vmatpush.msra.mxu0 %v680
        %762 = vmatpush.msra.mxu0 %v679
        %763 = vmatpush.msra.mxu0 %v678
        %764 = vmatpush.msra.mxu0 %v677
        %765 = vmatpush.msra.mxu0 %v676
        %766 = vmatpush.msra.mxu0 %v675
        %767 = vmatpush.msra.mxu0 %v674
        %768 = vmatpush.msra.mxu0 %v673
        %769 = vmatpush.msra.mxu0 %v672
        %770 = vmatmul.f32.gmra.mxu0 %v708
        %v771 = vpop.f32.mrf.mxu0
        %v772 = vadd.f32 %v752, %v771
        %773 = vdwg.mxu0
        %774 = vmatpush.msra.mxu0 %v703
        %775 = vmatpush.msra.mxu0 %v702
        %776 = vmatpush.msra.mxu0 %v701
        %777 = vmatpush.msra.mxu0 %v700
        %778 = vmatpush.msra.mxu0 %v699
        %779 = vmatpush.msra.mxu0 %v698
        %780 = vmatpush.msra.mxu0 %v697
        %781 = vmatpush.msra.mxu0 %v696
        %782 = vmatpush.msra.mxu0 %v695
        %783 = vmatpush.msra.mxu0 %v694
        %784 = vmatpush.msra.mxu0 %v693
        %785 = vmatpush.msra.mxu0 %v692
        %786 = vmatpush.msra.mxu0 %v691
        %787 = vmatpush.msra.mxu0 %v690
        %788 = vmatpush.msra.mxu0 %v689
        %789 = vmatpush.msra.mxu0 %v688
        %790 = vmatmul.f32.gmra.mxu0 %v709
        %v791 = vpop.f32.mrf.mxu0
        %v792 = vadd.f32 %v772, %v791
        %793 = vdwg.mxu0
        %v794 = vmax.f32 %v792, 0.0
        %vm795 = vcmask 253952
        %796 = vst.msk [vmem:[%s258] sm:$0x1] %vm795, %v794
        %s797 = sand.u32 %s164, 1
        %s798 = scalar_lea.sflag [#allocation5], %s797
        %s799 = sand.u32 %s164, 1
        %s800 = scalar_lea.vmem [#allocation4], %s799
        // Predicated region
        $region45: #{extractor_embeddings_forward.1} parent=43 // pred_check
          %p801 = pneg %p174
        $region46: #{extractor_embeddings_forward.1} parent=43 // pred_check_branch
          %803 = sbr.rel (%p801) target = $region48
        $region47: #{extractor_embeddings_forward.1} parent=43 // pred_region
          %805 = vsyncadd %s798, 0
          %s806 = scalar_lea.hbm %s6, %s20
          %s808 = sshll.u32 %s800, 4
          %s809 = int_to_ptr.vmem [resolvable:$true] %s808
          %s810 = sshll.u32 %s806, 4
          %s811 = int_to_ptr.hbm [resolvable:$true] %s810
          %813 = dma.vmem_to_hbm [thread:$0]  %s809, 16, %s811, %s798
        $region48: #{extractor_embeddings_forward.1} parent=43 // pred_fallthru
          _
      $region44: #{extractor_embeddings_forward.1} parent=5 // pred_fallthru
        _
      %p814 = scmp.le.s32.totalorder 2, %s15
      // Predicated region
      $region49: #{extractor_embeddings_forward.1} parent=5 // pred_check
        %p815 = pneg %p814
      $region50: #{extractor_embeddings_forward.1} parent=5 // pred_check_branch
        %817 = sbr.rel (%p815) target = $region52
      $region51: #{extractor_embeddings_forward.1} parent=5 // pred_region
        %s818 = ssub.s32 %s15, 2
        // Predicated region
        $region53: #{extractor_embeddings_forward.1} parent=51 // pred_check
          %p819 = pneg %p180
        $region54: #{extractor_embeddings_forward.1} parent=51 // pred_check_branch
          %821 = sbr.rel (%p819) target = $region56
        $region55: #{extractor_embeddings_forward.1} parent=51 // pred_region
          %s822 = sand.u32 %s165, 1
          %s823 = scalar_lea.sflag [#allocation5], %s822
          %s824 = sand.u32 %s165, 1
          %s825 = scalar_lea.vmem [#allocation4], %s824
          %827 = dma.done %s823, 16
        $region56: #{extractor_embeddings_forward.1} parent=51 // pred_fallthru
          _
      $region52: #{extractor_embeddings_forward.1} parent=5 // pred_fallthru
        _
    $region6: #{extractor_embeddings_forward.1} parent=1 // loop_footer
      %s19 = sadd.s32 1, %s15
    $region7: #{extractor_embeddings_forward.1} parent=1 // loop_footer_branch
      %14 = sbr.rel target = $region3
    $region8: #{extractor_embeddings_forward.1} parent=1 // loop_exit
      _
    %828 = vsyncpa [#allocation5], 1
    %s829 = scalar_lea.sflag [#allocation5], 1
    %830 = vsyncpa %s829, 1

</llo_original>
